<compile_context>
chip_gen: v6e
topology: v6e:2x2x1
jax: 0.10.0
libtpu: 0.0.40
codegen_flags: <defaults>
</compile_context>

<pallas_src>
import functools

import jax
import jax.numpy as jnp
from jax import lax
from jax.experimental import pallas as pl
from jax.experimental.pallas import tpu as pltpu

_LANE = 128
_SUBLANE = 8


def _stats_kernel(x_ref, y_ref,
                  bce_ref, inter_ref, spred_ref, sgt_ref,
                  *, hw, t_rows, need_mask):
    """Accumulate, per (n, c) row:
         bce   = sum of elementwise BCE-with-logits
         inter = sum of sigmoid(x) * y
         spred = sum of sigmoid(x)
         sgt   = sum of y
       Partials stay vreg-dense as (1, 8, 128); the wrapper reduces them."""
    t = pl.program_id(1)

    @pl.when(t == 0)
    def _init():
        bce_ref[...] = jnp.zeros_like(bce_ref)
        inter_ref[...] = jnp.zeros_like(inter_ref)
        spred_ref[...] = jnp.zeros_like(spred_ref)
        sgt_ref[...] = jnp.zeros_like(sgt_ref)

    x = x_ref[0].astype(jnp.float32)   # (t_rows, 128)
    y = y_ref[0].astype(jnp.float32)   # (t_rows, 128)

    # Stable BCE-with-logits: max(x, 0) - x*y + log(1 + exp(-|x|)).
    # Reuse z = exp(-|x|) for the sigmoid too: one exp + one log + one divide
    # per element on the EUP.
    z = jnp.exp(-jnp.abs(x))
    bce = jnp.maximum(x, 0.0) - x * y + jnp.log(1.0 + z)
    d = 1.0 / (1.0 + z)
    sig = jnp.where(x >= 0.0, d, z * d)       # == sigmoid(x), numerically stable

    if need_mask:
        # Zero contributions from spatial padding (padding lives at the end of
        # the flattened spatial axis).  y is zero-padded already, so only the
        # sigmoid / bce terms need masking.
        row = lax.broadcasted_iota(jnp.int32, (t_rows, _LANE), 0)
        col = lax.broadcasted_iota(jnp.int32, (t_rows, _LANE), 1)
        flat = (t * t_rows + row) * _LANE + col
        valid = flat < hw
        bce = jnp.where(valid, bce, 0.0)
        sig = jnp.where(valid, sig, 0.0)

    def fold(v):
        # (t_rows, 128) -> (1, 8, 128) via pure element-wise vreg adds.
        return v.reshape(t_rows // _SUBLANE, _SUBLANE, _LANE).sum(axis=0)[None]

    bce_ref[...] += fold(bce)
    inter_ref[...] += fold(sig * y)
    spred_ref[...] += fold(sig)
    sgt_ref[...] += fold(y)


def dc_and_bce_loss(net_output, target, *,
                    weight_ce=1.0, weight_dice=1.0,
                    smooth=1.0, batch_dice=False, do_bg=True,
                    max_tile_rows=2048):
    """JAX/Pallas port of DC_and_BCE_loss.forward(net_output, target).

    `target` must already be one-hot encoded / have the same shape as
    `net_output` (the `x.shape == y.shape` branch of MemoryEfficientSoftDiceLoss).
    Inputs are streamed in their native dtype; the cast to f32 happens in-kernel.
    """
    assert net_output.shape == target.shape
    N, C = net_output.shape[:2]
    hw = 1
    for s in net_output.shape[2:]:
        hw *= s
    nc = N * C

    x = net_output.reshape(nc, hw)
    y = target.reshape(nc, hw)          # keep native dtypes; cast inside kernel

    # Spatial tiling: pack the flattened spatial axis as (rows, 128) so it
    # fills whole (8, 128) vregs.  Pick the largest tile (<= max_tile_rows rows
    # of 128 lanes) that evenly covers the (minimally padded) spatial extent;
    # padding is masked inside the kernel.
    s128 = pl.cdiv(hw, _LANE)
    n_tiles = pl.cdiv(s128, max_tile_rows)
    t_rows = ((pl.cdiv(s128, n_tiles) + _SUBLANE - 1) // _SUBLANE) * _SUBLANE
    s128_pad = n_tiles * t_rows
    hw_pad = s128_pad * _LANE
    need_mask = hw_pad != hw

    if need_mask:
        x = jnp.pad(x, ((0, 0), (0, hw_pad - hw)))
        y = jnp.pad(y, ((0, 0), (0, hw_pad - hw)))
    x = x.reshape(nc, s128_pad, _LANE)
    y = y.reshape(nc, s128_pad, _LANE)

    kernel = functools.partial(_stats_kernel, hw=hw, t_rows=t_rows,
                               need_mask=need_mask)

    in_spec = pl.BlockSpec((1, t_rows, _LANE), lambda r, t: (r, t, 0))
    out_spec = pl.BlockSpec((1, _SUBLANE, _LANE), lambda r, t: (r, 0, 0))
    out_sds = jax.ShapeDtypeStruct((nc, _SUBLANE, _LANE), jnp.float32)

    bce_p, inter_p, spred_p, sgt_p = pl.pallas_call(
        kernel,
        out_shape=(out_sds, out_sds, out_sds, out_sds),
        grid_spec=pltpu.PrefetchScalarGridSpec(
            num_scalar_prefetch=0,
            grid=(nc, n_tiles),                       # reduction axis last
            in_specs=[in_spec, in_spec],
            out_specs=[out_spec, out_spec, out_spec, out_spec],
        ),
        compiler_params=pltpu.CompilerParams(
            dimension_semantics=("parallel", "arbitrary"),
            vmem_limit_bytes=32 * 1024 * 1024),       # safe on v5e/v6e/v7x
    )(x, y)

    # ----- tiny plain-JAX glue on the (N, C) statistics -----
    ce_loss = jnp.sum(bce_p) / (N * C * hw)           # BCEWithLogitsLoss (mean)

    intersect = jnp.sum(inter_p, axis=(1, 2)).reshape(N, C)
    sum_pred = jnp.sum(spred_p, axis=(1, 2)).reshape(N, C)
    sum_gt = jnp.sum(sgt_p, axis=(1, 2)).reshape(N, C)

    if not do_bg:
        intersect = intersect[:, 1:]
        sum_pred = sum_pred[:, 1:]
        sum_gt = sum_gt[:, 1:]
    if batch_dice:
        intersect = intersect.sum(0)
        sum_pred = sum_pred.sum(0)
        sum_gt = sum_gt.sum(0)

    dc = (2.0 * intersect + smooth) / jnp.maximum(sum_gt + sum_pred + smooth, 1e-8)
    dc_loss = -jnp.mean(dc)                           # MemoryEfficientSoftDiceLoss

    return weight_ce * ce_loss + weight_dice * dc_loss


def reference_loss(net_output, target, *, weight_ce=1.0, weight_dice=1.0,
                   smooth=1.0, batch_dice=False, do_bg=True):
    # Pure-JAX port of the PyTorch forward, for correctness checking.
    x = net_output.astype(jnp.float32)
    y = target.astype(jnp.float32)
    # nn.BCEWithLogitsLoss (mean reduction)
    ce = jnp.mean(jnp.maximum(x, 0.0) - x * y + jnp.log1p(jnp.exp(-jnp.abs(x))))
    # MemoryEfficientSoftDiceLoss with apply_nonlin=sigmoid, loss_mask=None
    p = jax.nn.sigmoid(x)
    axes = tuple(range(2, x.ndim))
    if not do_bg:
        p = p[:, 1:]
        y = y[:, 1:]
    intersect = jnp.sum(p * y, axis=axes)
    sum_pred = jnp.sum(p, axis=axes)
    sum_gt = jnp.sum(y, axis=axes)
    if batch_dice:
        intersect = intersect.sum(0)
        sum_pred = sum_pred.sum(0)
        sum_gt = sum_gt.sum(0)
    dc = (2.0 * intersect + smooth) / jnp.maximum(sum_gt + sum_pred + smooth, 1e-8)
    dc = jnp.mean(dc)
    return weight_ce * ce + weight_dice * (-dc)


if __name__ == "__main__":
    N, C, H, W = 2, 4, 16, 16
    key = jax.random.PRNGKey(0)
    kp, kl = jax.random.split(key)
    net_output = jax.random.normal(kp, (N, C, H, W), dtype=jnp.float32)
    cls = jax.random.randint(kl, (N, H, W), 0, C)
    target = jax.nn.one_hot(cls, C, axis=1, dtype=jnp.float32)  # (N, C, H, W)

    loss = dc_and_bce_loss(net_output, target)
    loss = jax.block_until_ready(loss)

    ref = reference_loss(net_output, target)
    assert jnp.allclose(loss, ref, rtol=1e-4, atol=1e-5), (float(loss), float(ref))

    print("KERNEL_OK")
</pallas_src>

<mosaic_0001>
module attributes {stable_mosaic.version = 11 : i64} {
  func.func @_stats_kernel(%arg0: i32, %arg1: i32, %arg2: memref<1x8x128xf32, #tpu.memory_space<vmem>>, %arg3: memref<1x8x128xf32, #tpu.memory_space<vmem>>, %arg4: memref<1x8x128xf32, #tpu.memory_space<vmem>>, %arg5: memref<1x8x128xf32, #tpu.memory_space<vmem>>, %arg6: memref<1x8x128xf32, #tpu.memory_space<vmem>>, %arg7: memref<1x8x128xf32, #tpu.memory_space<vmem>>) attributes {dimension_semantics = [#tpu.dimension_semantics<parallel>, #tpu.dimension_semantics<arbitrary>], iteration_bounds = array<i64: 8, 1>, scalar_prefetch = 0 : i64, scratch_operands = 0 : i64, tpu.core_type = #tpu.core_type<tc>, window_params = [{transform_indices = @transform_0, window_bounds = array<i64: 1, 8, 128>}, {transform_indices = @transform_1, window_bounds = array<i64: 1, 8, 128>}, {transform_indices = @transform_2, window_bounds = array<i64: 1, 8, 128>}, {transform_indices = @transform_3, window_bounds = array<i64: 1, 8, 128>}, {transform_indices = @transform_4, window_bounds = array<i64: 1, 8, 128>}, {transform_indices = @transform_5, window_bounds = array<i64: 1, 8, 128>}]} {
    %c0_i32 = arith.constant 0 : i32
    %0 = arith.cmpi eq, %arg1, %c0_i32 : i32
    %1 = arith.extui %0 : i1 to i32
    %c0_i32_0 = arith.constant 0 : i32
    %2 = arith.cmpi ne, %1, %c0_i32_0 : i32
    scf.if %2 {
      %cst_41 = arith.constant 0.000000e+00 : f32
      %66 = vector.broadcast %cst_41 : f32 to vector<1x8x128xf32>
      %c0_42 = arith.constant 0 : index
      %c0_43 = arith.constant 0 : index
      %c0_44 = arith.constant 0 : index
      %67 = vector.load %arg4[%c0_42, %c0_43, %c0_44] : memref<1x8x128xf32, #tpu.memory_space<vmem>>, vector<1x8x128xf32>
      tpu.vector_store %arg4[%c0_42, %c0_43, %c0_44], %66 {strides = array<i32>} : memref<1x8x128xf32, #tpu.memory_space<vmem>>, vector<1x8x128xf32>,
      %cst_45 = arith.constant 0.000000e+00 : f32
      %68 = vector.broadcast %cst_45 : f32 to vector<1x8x128xf32>
      %c0_46 = arith.constant 0 : index
      %c0_47 = arith.constant 0 : index
      %c0_48 = arith.constant 0 : index
      %69 = vector.load %arg5[%c0_46, %c0_47, %c0_48] : memref<1x8x128xf32, #tpu.memory_space<vmem>>, vector<1x8x128xf32>
      tpu.vector_store %arg5[%c0_46, %c0_47, %c0_48], %68 {strides = array<i32>} : memref<1x8x128xf32, #tpu.memory_space<vmem>>, vector<1x8x128xf32>,
      %cst_49 = arith.constant 0.000000e+00 : f32
      %70 = vector.broadcast %cst_49 : f32 to vector<1x8x128xf32>
      %c0_50 = arith.constant 0 : index
      %c0_51 = arith.constant 0 : index
      %c0_52 = arith.constant 0 : index
      %71 = vector.load %arg6[%c0_50, %c0_51, %c0_52] : memref<1x8x128xf32, #tpu.memory_space<vmem>>, vector<1x8x128xf32>
      tpu.vector_store %arg6[%c0_50, %c0_51, %c0_52], %70 {strides = array<i32>} : memref<1x8x128xf32, #tpu.memory_space<vmem>>, vector<1x8x128xf32>,
      %cst_53 = arith.constant 0.000000e+00 : f32
      %72 = vector.broadcast %cst_53 : f32 to vector<1x8x128xf32>
      %c0_54 = arith.constant 0 : index
      %c0_55 = arith.constant 0 : index
      %c0_56 = arith.constant 0 : index
      %73 = vector.load %arg7[%c0_54, %c0_55, %c0_56] : memref<1x8x128xf32, #tpu.memory_space<vmem>>, vector<1x8x128xf32>
      tpu.vector_store %arg7[%c0_54, %c0_55, %c0_56], %72 {strides = array<i32>} : memref<1x8x128xf32, #tpu.memory_space<vmem>>, vector<1x8x128xf32>,
    } else {
    }
    %c0 = arith.constant 0 : index
    %c0_1 = arith.constant 0 : index
    %c0_2 = arith.constant 0 : index
    %3 = vector.load %arg2[%c0, %c0_1, %c0_2] : memref<1x8x128xf32, #tpu.memory_space<vmem>>, vector<1x8x128xf32>
    %4 = vector.shape_cast %3 : vector<1x8x128xf32> to vector<8x128xf32>
    %c0_3 = arith.constant 0 : index
    %c0_4 = arith.constant 0 : index
    %c0_5 = arith.constant 0 : index
    %5 = vector.load %arg3[%c0_3, %c0_4, %c0_5] : memref<1x8x128xf32, #tpu.memory_space<vmem>>, vector<1x8x128xf32>
    %6 = vector.shape_cast %5 : vector<1x8x128xf32> to vector<8x128xf32>
    %7 = math.absf %4 : vector<8x128xf32>
    %cst = arith.constant 0.000000e+00 : f32
    %8 = vector.broadcast %cst : f32 to vector<8x128xf32>
    %9 = arith.subf %8, %7 : vector<8x128xf32>
    %10 = math.exp %9 : vector<8x128xf32>
    %cst_6 = arith.constant 0.000000e+00 : f32
    %11 = vector.broadcast %cst_6 : f32 to vector<8x128xf32>
    %12 = arith.maximumf %4, %11 : vector<8x128xf32>
    %13 = arith.mulf %4, %6 : vector<8x128xf32>
    %14 = arith.subf %12, %13 : vector<8x128xf32>
    %cst_7 = arith.constant 1.000000e+00 : f32
    %15 = vector.broadcast %cst_7 : f32 to vector<8x128xf32>
    %16 = arith.addf %15, %10 : vector<8x128xf32>
    %17 = math.log %16 : vector<8x128xf32>
    %18 = arith.addf %14, %17 : vector<8x128xf32>
    %cst_8 = arith.constant 1.000000e+00 : f32
    %19 = vector.broadcast %cst_8 : f32 to vector<8x128xf32>
    %20 = arith.addf %19, %10 : vector<8x128xf32>
    %cst_9 = arith.constant 1.000000e+00 : f32
    %21 = vector.broadcast %cst_9 : f32 to vector<8x128xf32>
    %22 = arith.divf %21, %20 : vector<8x128xf32>
    %cst_10 = arith.constant 0.000000e+00 : f32
    %23 = vector.broadcast %cst_10 : f32 to vector<8x128xf32>
    %24 = arith.cmpf oge, %4, %23 : vector<8x128xf32>
    %25 = arith.mulf %10, %22 : vector<8x128xf32>
    %26 = arith.select %24, %22, %25 : vector<8x128xi1>, vector<8x128xf32>
    %27 = tpu.iota {dimensions = array<i32: 0>} : vector<8x128xi32>
    %28 = tpu.iota {dimensions = array<i32: 1>} : vector<8x128xi32>
    %c8_i32 = arith.constant 8 : i32
    %29 = arith.muli %arg1, %c8_i32 : i32
    %30 = vector.broadcast %29 : i32 to vector<8x128xi32>
    %31 = arith.addi %30, %27 : vector<8x128xi32>
    %c128_i32 = arith.constant 128 : i32
    %32 = vector.broadcast %c128_i32 : i32 to vector<8x128xi32>
    %33 = arith.muli %31, %32 : vector<8x128xi32>
    %34 = arith.addi %33, %28 : vector<8x128xi32>
    %c256_i32 = arith.constant 256 : i32
    %35 = vector.broadcast %c256_i32 : i32 to vector<8x128xi32>
    %36 = arith.cmpi slt, %34, %35 : vector<8x128xi32>
    %cst_11 = arith.constant 0.000000e+00 : f32
    %37 = vector.broadcast %cst_11 : f32 to vector<8x128xf32>
    %38 = arith.select %36, %18, %37 : vector<8x128xi1>, vector<8x128xf32>
    %cst_12 = arith.constant 0.000000e+00 : f32
    %39 = vector.broadcast %cst_12 : f32 to vector<8x128xf32>
    %40 = arith.select %36, %26, %39 : vector<8x128xi1>, vector<8x128xf32>
    %c0_13 = arith.constant 0 : index
    %c0_14 = arith.constant 0 : index
    %c0_15 = arith.constant 0 : index
    %41 = vector.load %arg4[%c0_13, %c0_14, %c0_15] : memref<1x8x128xf32, #tpu.memory_space<vmem>>, vector<1x8x128xf32>
    %42 = vector.shape_cast %38 : vector<8x128xf32> to vector<1x8x128xf32>
    %cst_16 = arith.constant dense<0.000000e+00> : vector<8x128xf32>
    %43 = vector.multi_reduction <add>, %42, %cst_16 [0] : vector<1x8x128xf32> to vector<8x128xf32>
    %44 = vector.shape_cast %43 : vector<8x128xf32> to vector<1x8x128xf32>
    %45 = arith.addf %41, %44 : vector<1x8x128xf32>
    %c0_17 = arith.constant 0 : index
    %c0_18 = arith.constant 0 : index
    %c0_19 = arith.constant 0 : index
    %46 = vector.load %arg4[%c0_17, %c0_18, %c0_19] : memref<1x8x128xf32, #tpu.memory_space<vmem>>, vector<1x8x128xf32>
    tpu.vector_store %arg4[%c0_17, %c0_18, %c0_19], %45 {strides = array<i32>} : memref<1x8x128xf32, #tpu.memory_space<vmem>>, vector<1x8x128xf32>,
    %c0_20 = arith.constant 0 : index
    %c0_21 = arith.constant 0 : index
    %c0_22 = arith.constant 0 : index
    %47 = vector.load %arg5[%c0_20, %c0_21, %c0_22] : memref<1x8x128xf32, #tpu.memory_space<vmem>>, vector<1x8x128xf32>
    %48 = arith.mulf %40, %6 : vector<8x128xf32>
    %49 = vector.shape_cast %48 : vector<8x128xf32> to vector<1x8x128xf32>
    %cst_23 = arith.constant dense<0.000000e+00> : vector<8x128xf32>
    %50 = vector.multi_reduction <add>, %49, %cst_23 [0] : vector<1x8x128xf32> to vector<8x128xf32>
    %51 = vector.shape_cast %50 : vector<8x128xf32> to vector<1x8x128xf32>
    %52 = arith.addf %47, %51 : vector<1x8x128xf32>
    %c0_24 = arith.constant 0 : index
    %c0_25 = arith.constant 0 : index
    %c0_26 = arith.constant 0 : index
    %53 = vector.load %arg5[%c0_24, %c0_25, %c0_26] : memref<1x8x128xf32, #tpu.memory_space<vmem>>, vector<1x8x128xf32>
    tpu.vector_store %arg5[%c0_24, %c0_25, %c0_26], %52 {strides = array<i32>} : memref<1x8x128xf32, #tpu.memory_space<vmem>>, vector<1x8x128xf32>,
    %c0_27 = arith.constant 0 : index
    %c0_28 = arith.constant 0 : index
    %c0_29 = arith.constant 0 : index
    %54 = vector.load %arg6[%c0_27, %c0_28, %c0_29] : memref<1x8x128xf32, #tpu.memory_space<vmem>>, vector<1x8x128xf32>
    %55 = vector.shape_cast %40 : vector<8x128xf32> to vector<1x8x128xf32>
    %cst_30 = arith.constant dense<0.000000e+00> : vector<8x128xf32>
    %56 = vector.multi_reduction <add>, %55, %cst_30 [0] : vector<1x8x128xf32> to vector<8x128xf32>
    %57 = vector.shape_cast %56 : vector<8x128xf32> to vector<1x8x128xf32>
    %58 = arith.addf %54, %57 : vector<1x8x128xf32>
    %c0_31 = arith.constant 0 : index
    %c0_32 = arith.constant 0 : index
    %c0_33 = arith.constant 0 : index
    %59 = vector.load %arg6[%c0_31, %c0_32, %c0_33] : memref<1x8x128xf32, #tpu.memory_space<vmem>>, vector<1x8x128xf32>
    tpu.vector_store %arg6[%c0_31, %c0_32, %c0_33], %58 {strides = array<i32>} : memref<1x8x128xf32, #tpu.memory_space<vmem>>, vector<1x8x128xf32>,
    %c0_34 = arith.constant 0 : index
    %c0_35 = arith.constant 0 : index
    %c0_36 = arith.constant 0 : index
    %60 = vector.load %arg7[%c0_34, %c0_35, %c0_36] : memref<1x8x128xf32, #tpu.memory_space<vmem>>, vector<1x8x128xf32>
    %61 = vector.shape_cast %6 : vector<8x128xf32> to vector<1x8x128xf32>
    %cst_37 = arith.constant dense<0.000000e+00> : vector<8x128xf32>
    %62 = vector.multi_reduction <add>, %61, %cst_37 [0] : vector<1x8x128xf32> to vector<8x128xf32>
    %63 = vector.shape_cast %62 : vector<8x128xf32> to vector<1x8x128xf32>
    %64 = arith.addf %60, %63 : vector<1x8x128xf32>
    %c0_38 = arith.constant 0 : index
    %c0_39 = arith.constant 0 : index
    %c0_40 = arith.constant 0 : index
    %65 = vector.load %arg7[%c0_38, %c0_39, %c0_40] : memref<1x8x128xf32, #tpu.memory_space<vmem>>, vector<1x8x128xf32>
    tpu.vector_store %arg7[%c0_38, %c0_39, %c0_40], %64 {strides = array<i32>} : memref<1x8x128xf32, #tpu.memory_space<vmem>>, vector<1x8x128xf32>,
    return
  }
  func.func @transform_0(%arg0: i32, %arg1: i32) -> (i32, i32, i32) {
    %c0_i32 = arith.constant 0 : i32
    %c0_i32_0 = arith.constant 0 : i32
    return %arg0, %arg1, %c0_i32 : i32, i32, i32
  }
  func.func @transform_1(%arg0: i32, %arg1: i32) -> (i32, i32, i32) {
    %c0_i32 = arith.constant 0 : i32
    %c0_i32_0 = arith.constant 0 : i32
    return %arg0, %arg1, %c0_i32 : i32, i32, i32
  }
  func.func @transform_2(%arg0: i32, %arg1: i32) -> (i32, i32, i32) {
    %c0_i32 = arith.constant 0 : i32
    %c0_i32_0 = arith.constant 0 : i32
    %c0_i32_1 = arith.constant 0 : i32
    return %arg0, %c0_i32, %c0_i32_0 : i32, i32, i32
  }
  func.func @transform_3(%arg0: i32, %arg1: i32) -> (i32, i32, i32) {
    %c0_i32 = arith.constant 0 : i32
    %c0_i32_0 = arith.constant 0 : i32
    %c0_i32_1 = arith.constant 0 : i32
    return %arg0, %c0_i32, %c0_i32_0 : i32, i32, i32
  }
  func.func @transform_4(%arg0: i32, %arg1: i32) -> (i32, i32, i32) {
    %c0_i32 = arith.constant 0 : i32
    %c0_i32_0 = arith.constant 0 : i32
    %c0_i32_1 = arith.constant 0 : i32
    return %arg0, %c0_i32, %c0_i32_0 : i32, i32, i32
  }
  func.func @transform_5(%arg0: i32, %arg1: i32) -> (i32, i32, i32) {
    %c0_i32 = arith.constant 0 : i32
    %c0_i32_0 = arith.constant 0 : i32
    %c0_i32_1 = arith.constant 0 : i32
    return %arg0, %c0_i32, %c0_i32_0 : i32, i32, i32
  }
}

</mosaic_0001>

<llo_original>
// kernel: tpu_custom_call.1
$region0: #{tpu_custom_call.1}
  #allocation0 [shape = 'u32[]', space=smem, size = 0x4, offset = 0x4, fixed_abs, tag = 'smem constant byte address 0x4 - core index']
  #allocation1 [shape = 'u32[144,128]{1,0:T(1,128)}', space=vmem, size = 0x12000, scoped, tag = 'internal scratch']
  %s0 = inlined_call_operand.hbm [shape: f32[8,8,128], index: 0, kind: input, shape index: {}]
  %s1 = inlined_call_operand.hbm [shape: f32[8,8,128], index: 1, kind: input, shape index: {}]
  %s2 = inlined_call_operand.hbm [shape: f32[8,8,128], index: 2, kind: output, shape index: {0}]
  %s3 = inlined_call_operand.hbm [shape: f32[8,8,128], index: 3, kind: output, shape index: {1}]
  %s4 = inlined_call_operand.hbm [shape: f32[8,8,128], index: 4, kind: output, shape index: {2}]
  %s5 = inlined_call_operand.hbm [shape: f32[8,8,128], index: 5, kind: output, shape index: {3}]
  %6 = xla_tuple %s2, %s3, %s4, %s5
  %s7 = sld [smem:[#allocation0]]
  $region77: #{tpu_custom_call.1} parent=0
    _
  %s9 = ssub.s32 1, %s7
  %s10 = scalar_select 0, %s9, %s7
  $region1: #{tpu_custom_call.1} parent=0
    #allocation2 [shape = 'u8[8192]{0}', space=vmem, size = 0x2000, scoped, tag = 'input window, operand 0']
    #allocation3 [shape = 's32[2]{0}', space=sflag, size = 0x8, scoped, tag = 'scoped memory for tpu_custom_call.1']
    #allocation4 [shape = 's32[2]{0}', space=sflag, size = 0x8, scoped, tag = 'scoped memory for tpu_custom_call.1']
    #allocation5 [shape = 'u8[8192]{0}', space=vmem, size = 0x2000, scoped, tag = 'input window, operand 1']
    #allocation6 [shape = 's32[2]{0}', space=sflag, size = 0x8, scoped, tag = 'scoped memory for tpu_custom_call.1']
    #allocation7 [shape = 'u8[8192]{0}', space=vmem, size = 0x2000, scoped, tag = 'output window, operand 0']
    #allocation8 [shape = 'u8[8192]{0}', space=vmem, size = 0x2000, scoped, tag = 'output window, operand 1']
    #allocation9 [shape = 's32[2]{0}', space=sflag, size = 0x8, scoped, tag = 'scoped memory for tpu_custom_call.1']
    #allocation10 [shape = 'u8[8192]{0}', space=vmem, size = 0x2000, scoped, tag = 'output window, operand 2']
    #allocation11 [shape = 'u8[8192]{0}', space=vmem, size = 0x2000, scoped, tag = 'output window, operand 3']
    #allocation12 [shape = 's32[2]{0}', space=sflag, size = 0x8, scoped, tag = 'scoped memory for tpu_custom_call.1']
    %11 = vsyncpa [#allocation3], 0
    %s12 = scalar_lea.sflag [#allocation3], 1
    %13 = vsyncpa %s12, 0
    %14 = vsyncpa [#allocation6], 0
    %s15 = scalar_lea.sflag [#allocation6], 1
    %16 = vsyncpa %s15, 0
    %17 = vsyncpa [#allocation4], 0
    %s18 = scalar_lea.sflag [#allocation4], 1
    %19 = vsyncpa %s18, 0
    %20 = vsyncpa [#allocation9], 0
    %s21 = scalar_lea.sflag [#allocation9], 1
    %22 = vsyncpa %s21, 0
    %23 = vsyncpa [#allocation12], 0
    %s24 = scalar_lea.sflag [#allocation12], 1
    %25 = vsyncpa %s24, 0
    loop: start=0, step=1, limit=10
    $region2: #{tpu_custom_call.1} parent=1 // loop_pre_header
      _
    $region3: #{tpu_custom_call.1} parent=1 // loop_header
      %s27 = sphi 0, %s31
      %p28 = scmp.ge.s32.totalorder %s27, 10
      %s34 = sphi 0, %s46
      %s35 = sphi 0, %s42
      %s36 = sphi 0, %s34
      %s37 = sphi 0, %s35
      %s38 = sphi 0, %s36
      %s39 = sphi 0, %s37
      %s51 = sphi 0, %s53
      %s54 = sphi 0, %s51
      %s55 = sphi 0, %s54
      %s71 = sphi 0, %s55
      %s79 = sphi 0, %s81
      %s82 = sphi 0, %s79
      %s83 = sphi 0, %s82
      %s99 = sphi 0, %s83
      %s105 = sphi 0, %s107
      %s108 = sphi 0, %s105
      %s109 = sphi 0, %s108
      %s125 = sphi 0, %s109
      %s131 = sphi 0, %s133
      %s134 = sphi 0, %s131
      %s135 = sphi 0, %s134
      %s151 = sphi 0, %s135
      %s157 = sphi 0, %s159
      %s160 = sphi 0, %s157
      %s161 = sphi 0, %s160
      %s177 = sphi 0, %s161
      %s183 = sphi 0, %s185
      %s186 = sphi 0, %s183
      %s187 = sphi 0, %s186
      %s203 = sphi 0, %s187
    $region4: #{tpu_custom_call.1} parent=1 // loop_header_branch
      %30 = sbr.rel (%p28) target = $region8
    $region5: #{tpu_custom_call.1} parent=1 // loop_body
      %s32 = ssub.s32 %s27, 1
      %s33 = ssub.s32 %s27, 2
      %s40 = sadd.s32 1, %s35
      %p41 = scmp.ge.s32.totalorder %s40, 1
      %s42 = scalar_select %p41, 0, %s40
      %s43 = sadd.s32 1, %s34
      %s44 = scalar_select %p41, %s43, %s34
      %p45 = scmp.ge.s32.totalorder %s44, 8
      %s46 = scalar_select %p45, 0, %s44
      %s47 = ssub.s32 %s34, %s46
      %s48 = ssub.s32 %s35, %s42
      %s49 = sor.u32 %s47, %s48
      %p50 = scmp.eq.s32.totalorder %s49, 0
      %s52 = sadd.s32 %s51, 1
      %s53 = scalar_select %p50, %s51, %s52
      %p56 = pneg %p50
      %p57 = scmp.eq.s32.totalorder %s27, 7
      %p58 = por %p56, %p57
      %p59 = scmp.ne.s32.totalorder %s51, %s54
      %p60 = scmp.eq.s32.totalorder %s27, 0
      %p61 = por %p59, %p60
      %p62 = scmp.ne.s32.totalorder %s51, %s54
      %p63 = scmp.eq.s32.totalorder %s32, 7
      %p64 = por %p62, %p63
      %p65 = scmp.ne.s32.totalorder %s54, %s55
      %p66 = scmp.eq.s32.totalorder %s32, 0
      %p67 = por %p65, %p66
      %p68 = scmp.ne.s32.totalorder %s54, %s55
      %p69 = scmp.eq.s32.totalorder %s33, 7
      %p70 = por %p68, %p69
      %p72 = scmp.ne.s32.totalorder %s55, %s71
      %p73 = scmp.eq.s32.totalorder %s33, 0
      %p74 = por %p72, %p73
      %s75 = ssub.s32 %s34, %s46
      %s76 = ssub.s32 %s35, %s42
      %s77 = sor.u32 %s75, %s76
      %p78 = scmp.eq.s32.totalorder %s77, 0
      %s80 = sadd.s32 %s79, 1
      %s81 = scalar_select %p78, %s79, %s80
      %p84 = pneg %p78
      %p85 = scmp.eq.s32.totalorder %s27, 7
      %p86 = por %p84, %p85
      %p87 = scmp.ne.s32.totalorder %s79, %s82
      %p88 = scmp.eq.s32.totalorder %s27, 0
      %p89 = por %p87, %p88
      %p90 = scmp.ne.s32.totalorder %s79, %s82
      %p91 = scmp.eq.s32.totalorder %s32, 7
      %p92 = por %p90, %p91
      %p93 = scmp.ne.s32.totalorder %s82, %s83
      %p94 = scmp.eq.s32.totalorder %s32, 0
      %p95 = por %p93, %p94
      %p96 = scmp.ne.s32.totalorder %s82, %s83
      %p97 = scmp.eq.s32.totalorder %s33, 7
      %p98 = por %p96, %p97
      %p100 = scmp.ne.s32.totalorder %s83, %s99
      %p101 = scmp.eq.s32.totalorder %s33, 0
      %p102 = por %p100, %p101
      %s103 = ssub.s32 %s34, %s46
      %p104 = scmp.eq.s32.totalorder %s103, 0
      %s106 = sadd.s32 %s105, 1
      %s107 = scalar_select %p104, %s105, %s106
      %p110 = pneg %p104
      %p111 = scmp.eq.s32.totalorder %s27, 7
      %p112 = por %p110, %p111
      %p113 = scmp.ne.s32.totalorder %s105, %s108
      %p114 = scmp.eq.s32.totalorder %s27, 0
      %p115 = por %p113, %p114
      %p116 = scmp.ne.s32.totalorder %s105, %s108
      %p117 = scmp.eq.s32.totalorder %s32, 7
      %p118 = por %p116, %p117
      %p119 = scmp.ne.s32.totalorder %s108, %s109
      %p120 = scmp.eq.s32.totalorder %s32, 0
      %p121 = por %p119, %p120
      %p122 = scmp.ne.s32.totalorder %s108, %s109
      %p123 = scmp.eq.s32.totalorder %s33, 7
      %p124 = por %p122, %p123
      %p126 = scmp.ne.s32.totalorder %s109, %s125
      %p127 = scmp.eq.s32.totalorder %s33, 0
      %p128 = por %p126, %p127
      %s129 = ssub.s32 %s34, %s46
      %p130 = scmp.eq.s32.totalorder %s129, 0
      %s132 = sadd.s32 %s131, 1
      %s133 = scalar_select %p130, %s131, %s132
      %p136 = pneg %p130
      %p137 = scmp.eq.s32.totalorder %s27, 7
      %p138 = por %p136, %p137
      %p139 = scmp.ne.s32.totalorder %s131, %s134
      %p140 = scmp.eq.s32.totalorder %s27, 0
      %p141 = por %p139, %p140
      %p142 = scmp.ne.s32.totalorder %s131, %s134
      %p143 = scmp.eq.s32.totalorder %s32, 7
      %p144 = por %p142, %p143
      %p145 = scmp.ne.s32.totalorder %s134, %s135
      %p146 = scmp.eq.s32.totalorder %s32, 0
      %p147 = por %p145, %p146
      %p148 = scmp.ne.s32.totalorder %s134, %s135
      %p149 = scmp.eq.s32.totalorder %s33, 7
      %p150 = por %p148, %p149
      %p152 = scmp.ne.s32.totalorder %s135, %s151
      %p153 = scmp.eq.s32.totalorder %s33, 0
      %p154 = por %p152, %p153
      %s155 = ssub.s32 %s34, %s46
      %p156 = scmp.eq.s32.totalorder %s155, 0
      %s158 = sadd.s32 %s157, 1
      %s159 = scalar_select %p156, %s157, %s158
      %p162 = pneg %p156
      %p163 = scmp.eq.s32.totalorder %s27, 7
      %p164 = por %p162, %p163
      %p165 = scmp.ne.s32.totalorder %s157, %s160
      %p166 = scmp.eq.s32.totalorder %s27, 0
      %p167 = por %p165, %p166
      %p168 = scmp.ne.s32.totalorder %s157, %s160
      %p169 = scmp.eq.s32.totalorder %s32, 7
      %p170 = por %p168, %p169
      %p171 = scmp.ne.s32.totalorder %s160, %s161
      %p172 = scmp.eq.s32.totalorder %s32, 0
      %p173 = por %p171, %p172
      %p174 = scmp.ne.s32.totalorder %s160, %s161
      %p175 = scmp.eq.s32.totalorder %s33, 7
      %p176 = por %p174, %p175
      %p178 = scmp.ne.s32.totalorder %s161, %s177
      %p179 = scmp.eq.s32.totalorder %s33, 0
      %p180 = por %p178, %p179
      %s181 = ssub.s32 %s34, %s46
      %p182 = scmp.eq.s32.totalorder %s181, 0
      %s184 = sadd.s32 %s183, 1
      %s185 = scalar_select %p182, %s183, %s184
      %p188 = pneg %p182
      %p189 = scmp.eq.s32.totalorder %s27, 7
      %p190 = por %p188, %p189
      %p191 = scmp.ne.s32.totalorder %s183, %s186
      %p192 = scmp.eq.s32.totalorder %s27, 0
      %p193 = por %p191, %p192
      %p194 = scmp.ne.s32.totalorder %s183, %s186
      %p195 = scmp.eq.s32.totalorder %s32, 7
      %p196 = por %p194, %p195
      %p197 = scmp.ne.s32.totalorder %s186, %s187
      %p198 = scmp.eq.s32.totalorder %s32, 0
      %p199 = por %p197, %p198
      %p200 = scmp.ne.s32.totalorder %s186, %s187
      %p201 = scmp.eq.s32.totalorder %s33, 7
      %p202 = por %p200, %p201
      %p204 = scmp.ne.s32.totalorder %s187, %s203
      %p205 = scmp.eq.s32.totalorder %s33, 0
      %p206 = por %p204, %p205
      %p207 = scmp.le.s32.totalorder 1, %s27
      %p208 = scmp.lt.s32.totalorder %s27, 9
      %p209 = pnand %p207, %p208
      %p210 = pneg %p209
      // Predicated region
      $region9: #{tpu_custom_call.1} parent=5 // pred_check
        _
      $region10: #{tpu_custom_call.1} parent=5 // pred_check_branch
        %212 = sbr.rel (%p209) target = $region12
      $region11: #{tpu_custom_call.1} parent=5 // pred_region
        %s213 = ssub.s32 %s27, 1
      $region12: #{tpu_custom_call.1} parent=5 // pred_fallthru
        _
      %p214 = scmp.lt.s32.totalorder %s27, 8
      // Predicated region
      $region13: #{tpu_custom_call.1} parent=5 // pred_check
        %p215 = pneg %p214
      $region14: #{tpu_custom_call.1} parent=5 // pred_check_branch
        %217 = sbr.rel (%p215) target = $region16
      $region15: #{tpu_custom_call.1} parent=5 // pred_region
        // Predicated region
        $region17: #{tpu_custom_call.1} parent=15 // pred_check
          %p218 = pneg %p61
        $region18: #{tpu_custom_call.1} parent=15 // pred_check_branch
          %220 = sbr.rel (%p218) target = $region20
        $region19: #{tpu_custom_call.1} parent=15 // pred_region
          %s221 = sand.u32 %s51, 1
          %s222 = scalar_lea.sflag [#allocation3], %s221
          %s223 = sand.u32 %s51, 1
          %s224 = smul.addr %s223, 8
          %s225 = scalar_lea.vmem [#allocation2], %s224
          %s227 = ssub.s32 128, 128
          %228 = vsyncadd %s222, %s227
          %s229 = sadd.s32 %s35, %s34
          %s230 = smul.addr %s229, 128
          %s231 = scalar_lea.hbm %s0, %s230
          %s233 = sshll.u32 %s225, 4
          %s234 = int_to_ptr.vmem [resolvable:$true] %s233
          %236 = dma.hbm_to_vmem [thread:$0]  %s231, 128, %s234, %s222
        $region20: #{tpu_custom_call.1} parent=15 // pred_fallthru
          _
        // Predicated region
        $region21: #{tpu_custom_call.1} parent=15 // pred_check
          %p237 = pneg %p89
        $region22: #{tpu_custom_call.1} parent=15 // pred_check_branch
          %239 = sbr.rel (%p237) target = $region24
        $region23: #{tpu_custom_call.1} parent=15 // pred_region
          %s240 = sand.u32 %s79, 1
          %s241 = scalar_lea.sflag [#allocation6], %s240
          %s242 = sand.u32 %s79, 1
          %s243 = smul.addr %s242, 8
          %s244 = scalar_lea.vmem [#allocation5], %s243
          %s246 = ssub.s32 128, 128
          %247 = vsyncadd %s241, %s246
          %s248 = sadd.s32 %s35, %s34
          %s249 = smul.addr %s248, 128
          %s250 = scalar_lea.hbm %s1, %s249
          %s252 = sshll.u32 %s244, 4
          %s253 = int_to_ptr.vmem [resolvable:$true] %s252
          %255 = dma.hbm_to_vmem [thread:$0]  %s250, 128, %s253, %s241
        $region24: #{tpu_custom_call.1} parent=15 // pred_fallthru
          _
      $region16: #{tpu_custom_call.1} parent=5 // pred_fallthru
        _
      %p256 = scmp.le.s32.totalorder 1, %s27
      %p257 = scmp.lt.s32.totalorder %s27, 9
      %p258 = pnand %p256, %p257
      %p259 = pneg %p258
      // Predicated region
      $region25: #{tpu_custom_call.1} parent=5 // pred_check
        _
      $region26: #{tpu_custom_call.1} parent=5 // pred_check_branch
        %261 = sbr.rel (%p258) target = $region28
      $region27: #{tpu_custom_call.1} parent=5 // pred_region
        %s262 = ssub.s32 %s27, 1
        %s263 = sand.u32 %s54, 1
        %s264 = scalar_lea.sflag [#allocation3], %s263
        %s265 = sand.u32 %s54, 1
        %s266 = smul.addr %s265, 8
        %s267 = scalar_lea.vmem [#allocation2], %s266
        // Predicated region
        $region29: #{tpu_custom_call.1} parent=27 // pred_check
          %p268 = pneg %p67
        $region30: #{tpu_custom_call.1} parent=27 // pred_check_branch
          %270 = sbr.rel (%p268) target = $region32
        $region31: #{tpu_custom_call.1} parent=27 // pred_region
          %271 = dma.done %s264, 128
        $region32: #{tpu_custom_call.1} parent=27 // pred_fallthru
          _
        %s272 = sand.u32 %s82, 1
        %s273 = scalar_lea.sflag [#allocation6], %s272
        %s274 = sand.u32 %s82, 1
        %s275 = smul.addr %s274, 8
        %s276 = scalar_lea.vmem [#allocation5], %s275
        // Predicated region
        $region33: #{tpu_custom_call.1} parent=27 // pred_check
          %p277 = pneg %p95
        $region34: #{tpu_custom_call.1} parent=27 // pred_check_branch
          %279 = sbr.rel (%p277) target = $region36
        $region35: #{tpu_custom_call.1} parent=27 // pred_region
          %280 = dma.done %s273, 128
        $region36: #{tpu_custom_call.1} parent=27 // pred_fallthru
          _
        %s281 = sand.u32 %s54, 1
        %s282 = scalar_lea.sflag [#allocation3], %s281
        %s283 = sand.u32 %s54, 1
        %s284 = smul.addr %s283, 8
        %s285 = scalar_lea.vmem [#allocation2], %s284
        %p286 = pneg %p67
        %p287 = pneg %p64
        %s288 = sand.u32 %s82, 1
        %s289 = scalar_lea.sflag [#allocation6], %s288
        %s290 = sand.u32 %s82, 1
        %s291 = smul.addr %s290, 8
        %s292 = scalar_lea.vmem [#allocation5], %s291
        %p293 = pneg %p95
        %p294 = pneg %p92
        %p295 = pneg %p121
        %p296 = pneg %p118
        %s297 = sand.u32 %s108, 1
        %s298 = scalar_lea.sflag [#allocation4], %s297
        %s299 = sand.u32 %s108, 1
        %s300 = smul.addr %s299, 8
        %s301 = scalar_lea.vmem [#allocation7], %s300
        %p302 = pneg %p147
        %p303 = pneg %p144
        %s304 = sand.u32 %s32, 1
        %s305 = scalar_lea.sflag [#allocation9], %s304
        %s306 = sand.u32 %s134, 1
        %s307 = smul.addr %s306, 8
        %s308 = scalar_lea.vmem [#allocation8], %s307
        %p309 = pneg %p173
        %p310 = pneg %p170
        %s311 = sand.u32 %s32, 1
        %s312 = scalar_lea.sflag [#allocation9], %s311
        %s313 = sand.u32 %s160, 1
        %s314 = smul.addr %s313, 8
        %s315 = scalar_lea.vmem [#allocation10], %s314
        %p316 = pneg %p199
        %p317 = pneg %p196
        %s318 = sand.u32 %s186, 1
        %s319 = scalar_lea.sflag [#allocation12], %s318
        %s320 = sand.u32 %s186, 1
        %s321 = smul.addr %s320, 8
        %s322 = scalar_lea.vmem [#allocation11], %s321
        %p323 = scmp.eq.s32.totalorder %s37, 0
        // Predicated region
        $region37: #{tpu_custom_call.1} parent=27 // pred_check
          %p324 = pneg %p323
        $region38: #{tpu_custom_call.1} parent=27 // pred_check_branch
          %326 = sbr.rel (%p324) target = $region40
        $region39: #{tpu_custom_call.1} parent=27 // pred_region
          %327 = vst [vmem:[%s301] sm:$0xff] 0.0
          %328 = vst [vmem:[%s308] sm:$0xff] 0.0
          %329 = vst [vmem:[%s315] sm:$0xff] 0.0
          %330 = vst [vmem:[%s322] sm:$0xff] 0.0
        $region40: #{tpu_custom_call.1} parent=27 // pred_fallthru
          _
        %v331 = vld [vmem:[%s267] sm:$0xff]
        %v332 = vld [vmem:[%s276] sm:$0xff]
        %v333 = vand.u32 2147483647, %v331
        %v334 = vsub.f32 0.0, %v333
        %v335 = vmul.f32 %v334, 1.442695
        %v336 = vpow.pop %v335
        %v337 = vmax.f32 %v331, 0.0
        %v338 = vmul.f32 %v331, %v332
        %v339 = vsub.f32 %v337, %v338
        %v340 = vadd.f32 %v336, 1.0
        %v341 = vlog2.pop %v340
        %v342 = vmul.f32 %v341, 0.6931472
        %v343 = vadd.f32 %v339, %v342
        %v344 = vrcp.pop %v340
        %v345 = vmul.f32 1.0, %v344
        %vm346 = vcmp.ge.f32.partialorder %v331, 0.0
        %v347 = vmul.f32 %v336, %v345
        %v348 = vsel %vm346, %v345, %v347
        %v349 = vlaneseq
        %v350 = vshrl.u32 %v349, 7
        %v351 = vlaneseq
        %v352 = vand.u32 %v351, 127
        %s353 = smul.u32 %s37, 8
        %v354 = vstv %s353
        %v355 = vadd.s32 %v354, %v350
        %v356 = vmul.u32 %v355, 128
        %v357 = vadd.s32 %v356, %v352
        %vm358 = vcmp.lt.s32.totalorder %v357, 256
        %v359 = vsel %vm358, %v343, 0.0
        %v360 = vsel %vm358, %v348, 0.0
        %v361 = vld [vmem:[%s301] sm:$0xff]
        %v362 = vadd.f32 %v359, 0.0
        %v363 = vadd.f32 %v361, %v362
        %364 = vst [vmem:[%s301] sm:$0xff] %v363
        %v365 = vld [vmem:[%s308] sm:$0xff]
        %v366 = vmul.f32 %v360, %v332
        %v367 = vadd.f32 %v366, 0.0
        %v368 = vadd.f32 %v365, %v367
        %369 = vst [vmem:[%s308] sm:$0xff] %v368
        %v370 = vld [vmem:[%s315] sm:$0xff]
        %v371 = vadd.f32 %v360, 0.0
        %v372 = vadd.f32 %v370, %v371
        %373 = vst [vmem:[%s315] sm:$0xff] %v372
        %v374 = vld [vmem:[%s322] sm:$0xff]
        %v375 = vadd.f32 %v332, 0.0
        %v376 = vadd.f32 %v374, %v375
        %377 = vst [vmem:[%s322] sm:$0xff] %v376
        %s378 = sand.u32 %s108, 1
        %s379 = scalar_lea.sflag [#allocation4], %s378
        %s380 = sand.u32 %s108, 1
        %s381 = smul.addr %s380, 8
        %s382 = scalar_lea.vmem [#allocation7], %s381
        %s383 = sand.u32 %s32, 1
        %s384 = scalar_lea.sflag [#allocation9], %s383
        %s385 = sand.u32 %s134, 1
        %s386 = smul.addr %s385, 8
        %s387 = scalar_lea.vmem [#allocation8], %s386
        %s388 = sand.u32 %s32, 1
        %s389 = scalar_lea.sflag [#allocation9], %s388
        %s390 = sand.u32 %s160, 1
        %s391 = smul.addr %s390, 8
        %s392 = scalar_lea.vmem [#allocation10], %s391
        %s393 = sand.u32 %s186, 1
        %s394 = scalar_lea.sflag [#allocation12], %s393
        %s395 = sand.u32 %s186, 1
        %s396 = smul.addr %s395, 8
        %s397 = scalar_lea.vmem [#allocation11], %s396
        // Predicated region
        $region41: #{tpu_custom_call.1} parent=27 // pred_check
          %p398 = pneg %p118
        $region42: #{tpu_custom_call.1} parent=27 // pred_check_branch
          %400 = sbr.rel (%p398) target = $region44
        $region43: #{tpu_custom_call.1} parent=27 // pred_region
          %s402 = ssub.s32 128, 128
          %403 = vsyncadd %s379, %s402
          %s404 = smul.addr %s36, 128
          %s405 = scalar_lea.hbm %s2, %s404
          %s407 = sshll.u32 %s382, 4
          %s408 = int_to_ptr.vmem [resolvable:$true] %s407
          %410 = dma.vmem_to_hbm [thread:$0]  %s408, 128, %s405, %s379
        $region44: #{tpu_custom_call.1} parent=27 // pred_fallthru
          _
        // Predicated region
        $region45: #{tpu_custom_call.1} parent=27 // pred_check
          %p411 = pneg %p144
        $region46: #{tpu_custom_call.1} parent=27 // pred_check_branch
          %413 = sbr.rel (%p411) target = $region48
        $region47: #{tpu_custom_call.1} parent=27 // pred_region
          %s415 = ssub.s32 128, 128
          %416 = vsyncadd %s384, %s415
          %s417 = smul.addr %s36, 128
          %s418 = scalar_lea.hbm %s3, %s417
          %s420 = sshll.u32 %s387, 4
          %s421 = int_to_ptr.vmem [resolvable:$true] %s420
          %423 = dma.vmem_to_hbm [thread:$0]  %s421, 128, %s418, %s384
        $region48: #{tpu_custom_call.1} parent=27 // pred_fallthru
          _
        // Predicated region
        $region49: #{tpu_custom_call.1} parent=27 // pred_check
          %p424 = pneg %p170
        $region50: #{tpu_custom_call.1} parent=27 // pred_check_branch
          %426 = sbr.rel (%p424) target = $region52
        $region51: #{tpu_custom_call.1} parent=27 // pred_region
          %s428 = ssub.s32 128, 128
          %429 = vsyncadd %s389, %s428
          %s430 = smul.addr %s36, 128
          %s431 = scalar_lea.hbm %s4, %s430
          %s433 = sshll.u32 %s392, 4
          %s434 = int_to_ptr.vmem [resolvable:$true] %s433
          %436 = dma.vmem_to_hbm [thread:$0]  %s434, 128, %s431, %s389
        $region52: #{tpu_custom_call.1} parent=27 // pred_fallthru
          _
        // Predicated region
        $region53: #{tpu_custom_call.1} parent=27 // pred_check
          %p437 = pneg %p196
        $region54: #{tpu_custom_call.1} parent=27 // pred_check_branch
          %439 = sbr.rel (%p437) target = $region56
        $region55: #{tpu_custom_call.1} parent=27 // pred_region
          %s441 = ssub.s32 128, 128
          %442 = vsyncadd %s394, %s441
          %s443 = smul.addr %s36, 128
          %s444 = scalar_lea.hbm %s5, %s443
          %s446 = sshll.u32 %s397, 4
          %s447 = int_to_ptr.vmem [resolvable:$true] %s446
          %449 = dma.vmem_to_hbm [thread:$0]  %s447, 128, %s444, %s394
        $region56: #{tpu_custom_call.1} parent=27 // pred_fallthru
          _
      $region28: #{tpu_custom_call.1} parent=5 // pred_fallthru
        _
      %p450 = scmp.le.s32.totalorder 2, %s27
      // Predicated region
      $region57: #{tpu_custom_call.1} parent=5 // pred_check
        %p451 = pneg %p450
      $region58: #{tpu_custom_call.1} parent=5 // pred_check_branch
        %453 = sbr.rel (%p451) target = $region60
      $region59: #{tpu_custom_call.1} parent=5 // pred_region
        %s454 = ssub.s32 %s27, 2
        // Predicated region
        $region61: #{tpu_custom_call.1} parent=59 // pred_check
          %p455 = pneg %p124
        $region62: #{tpu_custom_call.1} parent=59 // pred_check_branch
          %457 = sbr.rel (%p455) target = $region64
        $region63: #{tpu_custom_call.1} parent=59 // pred_region
          %s458 = sand.u32 %s109, 1
          %s459 = scalar_lea.sflag [#allocation4], %s458
          %s460 = sand.u32 %s109, 1
          %s461 = smul.addr %s460, 8
          %s462 = scalar_lea.vmem [#allocation7], %s461
          %463 = dma.done %s459, 128
        $region64: #{tpu_custom_call.1} parent=59 // pred_fallthru
          _
        // Predicated region
        $region65: #{tpu_custom_call.1} parent=59 // pred_check
          %p464 = pneg %p150
        $region66: #{tpu_custom_call.1} parent=59 // pred_check_branch
          %466 = sbr.rel (%p464) target = $region68
        $region67: #{tpu_custom_call.1} parent=59 // pred_region
          %s467 = sand.u32 %s33, 1
          %s468 = scalar_lea.sflag [#allocation9], %s467
          %s469 = sand.u32 %s135, 1
          %s470 = smul.addr %s469, 8
          %s471 = scalar_lea.vmem [#allocation8], %s470
          %472 = dma.done %s468, 128
        $region68: #{tpu_custom_call.1} parent=59 // pred_fallthru
          _
        // Predicated region
        $region69: #{tpu_custom_call.1} parent=59 // pred_check
          %p473 = pneg %p176
        $region70: #{tpu_custom_call.1} parent=59 // pred_check_branch
          %475 = sbr.rel (%p473) target = $region72
        $region71: #{tpu_custom_call.1} parent=59 // pred_region
          %s476 = sand.u32 %s33, 1
          %s477 = scalar_lea.sflag [#allocation9], %s476
          %s478 = sand.u32 %s161, 1
          %s479 = smul.addr %s478, 8
          %s480 = scalar_lea.vmem [#allocation10], %s479
          %481 = dma.done %s477, 128
        $region72: #{tpu_custom_call.1} parent=59 // pred_fallthru
          _
        // Predicated region
        $region73: #{tpu_custom_call.1} parent=59 // pred_check
          %p482 = pneg %p202
        $region74: #{tpu_custom_call.1} parent=59 // pred_check_branch
          %484 = sbr.rel (%p482) target = $region76
        $region75: #{tpu_custom_call.1} parent=59 // pred_region
          %s485 = sand.u32 %s187, 1
          %s486 = scalar_lea.sflag [#allocation12], %s485
          %s487 = sand.u32 %s187, 1
          %s488 = smul.addr %s487, 8
          %s489 = scalar_lea.vmem [#allocation11], %s488
          %490 = dma.done %s486, 128
        $region76: #{tpu_custom_call.1} parent=59 // pred_fallthru
          _
      $region60: #{tpu_custom_call.1} parent=5 // pred_fallthru
        _
    $region6: #{tpu_custom_call.1} parent=1 // loop_footer
      %s31 = sadd.s32 1, %s27
    $region7: #{tpu_custom_call.1} parent=1 // loop_footer_branch
      %26 = sbr.rel target = $region3
    $region8: #{tpu_custom_call.1} parent=1 // loop_exit
      _
    %491 = vsyncpa [#allocation3], 1
    %s492 = scalar_lea.sflag [#allocation3], 1
    %493 = vsyncpa %s492, 1
    %494 = vsyncpa [#allocation6], 1
    %s495 = scalar_lea.sflag [#allocation6], 1
    %496 = vsyncpa %s495, 1
    %497 = vsyncpa [#allocation4], 1
    %s498 = scalar_lea.sflag [#allocation4], 1
    %499 = vsyncpa %s498, 1
    %500 = vsyncpa [#allocation9], 1
    %s501 = scalar_lea.sflag [#allocation9], 1
    %502 = vsyncpa %s501, 1
    %503 = vsyncpa [#allocation12], 1
    %s504 = scalar_lea.sflag [#allocation12], 1
    %505 = vsyncpa %s504, 1

</llo_original>
